<compile_context>
chip_gen: v7x
topology: tpu7x:2x2x1
jax: 0.10.0
libtpu: 0.0.40
codegen_flags: <defaults>
</compile_context>

<pallas_src>
import functools
import math

import jax
import jax.numpy as jnp
from jax.experimental import pallas as pl
from jax.experimental.pallas import tpu as pltpu


def _cross_attn_kernel(w_ref, x1_ref, x2_ref, o_ref, *, inv_scale):
    # w_ref: SMEM (3,) scalars = [wq, wk, wv]  (d_model == 1 Linear weights).
    wq = w_ref[0]
    wk = w_ref[1] * inv_scale          # fold 1/sqrt(d_model) into the K scalar
    wv = w_ref[2]

    x1 = x1_ref[...]                   # (1, S) lane-dense (S on the lane axis)
    x2 = x2_ref[...]                   # (1, S)

    # Projections: pure VPU scalar-broadcast multiplies (no MXU).
    q = x1 * wq                        # (1, S)
    k = x2 * wk                        # (1, S)  (already scaled)
    v = x2 * wv                        # (1, S)

    # scores[i, j] = q[i] * k[j] / sqrt(d)  ->  outer product via broadcast.
    q_col = jnp.transpose(q)           # (S, 1): one tiny XLU relayout
    scores = q_col * k                 # (S, S) f32

    # Numerically stable softmax over the key (lane) axis.
    m = jnp.max(scores, axis=-1, keepdims=True)            # (S, 1)
    p = jnp.exp(scores - m)                                 # (S, S)
    denom = jnp.sum(p, axis=-1, keepdims=True)              # (S, 1)
    attn = p * pl.reciprocal(denom, approx=True)            # EUP vrcp

    # out[i] = sum_j attn[i, j] * v[j]   (broadcast-mul + lane reduction).
    out_col = jnp.sum(attn * v, axis=-1, keepdims=True)     # (S, 1)
    o_ref[...] = jnp.transpose(out_col).astype(o_ref.dtype)  # (1, S) dense store


def cross_attention(x1, x2, wq, wk, wv):
    """x1, x2: (B, S, 1); wq/wk/wv: (1, 1) torch.nn.Linear weights. -> (B, S, 1)."""
    B, S, D = x1.shape
    assert D == 1, "this kernel specializes the d_model == 1 module"
    inv_scale = 1.0 / math.sqrt(float(D))

    # Lane-dense layout: drop the trailing d_model=1 dim in the wrapper so the
    # sequence axis maps to the 128-lane axis inside the kernel.
    x1_2d = x1.reshape(B, S)
    x2_2d = x2.reshape(B, S)
    w = jnp.stack(
        [wq.reshape(()), wk.reshape(()), wv.reshape(())]
    ).astype(jnp.float32)                                   # (3,) -> SMEM

    kernel = functools.partial(_cross_attn_kernel, inv_scale=inv_scale)

    out_2d = pl.pallas_call(
        kernel,
        out_shape=jax.ShapeDtypeStruct((B, S), x1.dtype),
        grid=(B,),
        in_specs=[
            # Weights live in SMEM as scalars; no VMEM tile, no per-step DMA.
            pl.BlockSpec(memory_space=pltpu.MemorySpace.SMEM),
            pl.BlockSpec((1, S), lambda b: (b, 0)),
            pl.BlockSpec((1, S), lambda b: (b, 0)),
        ],
        out_specs=pl.BlockSpec((1, S), lambda b: (b, 0)),
        compiler_params=pltpu.CompilerParams(
            dimension_semantics=("parallel",),
        ),
    )(w, x1_2d, x2_2d)

    return out_2d.reshape(B, S, D)


def cross_attention_ref(x1, x2, wq, wk, wv):
    d = x1.shape[-1]
    q = jnp.einsum("bsd,ed->bse", x1, wq)
    k = jnp.einsum("bsd,ed->bse", x2, wk)
    v = jnp.einsum("bsd,ed->bse", x2, wv)
    scores = jnp.einsum("bqd,bkd->bqk", q, k) / jnp.sqrt(jnp.float32(d))
    attn = jax.nn.softmax(scores, axis=-1)
    return jnp.einsum("bqk,bkd->bqd", attn, v)


if __name__ == "__main__":
    # Shapes implied by the module's usage: x1, x2 = (1, 64, 1), d_model = 1.
    B, S, D = 1, 64, 1

    key = jax.random.PRNGKey(0)
    k_x1, k_x2, k_wq, k_wk, k_wv = jax.random.split(key, 5)

    x1 = jax.random.normal(k_x1, (B, S, D), dtype=jnp.float32)
    x2 = jax.random.normal(k_x2, (B, S, D), dtype=jnp.float32)

    # torch.nn.Linear(d_model, d_model, bias=False) weights: shape (D, D),
    # uniform(-1/sqrt(D), 1/sqrt(D)) init.
    bound = 1.0 / math.sqrt(D)
    wq = jax.random.uniform(k_wq, (D, D), jnp.float32, -bound, bound)
    wk = jax.random.uniform(k_wk, (D, D), jnp.float32, -bound, bound)
    wv = jax.random.uniform(k_wv, (D, D), jnp.float32, -bound, bound)

    out = cross_attention(x1, x2, wq, wk, wv)
    out = jax.block_until_ready(out)

    ref = cross_attention_ref(x1, x2, wq, wk, wv)
    assert out.shape == (B, S, D)
    # approx=True reciprocal (EUP vrcp) loosens accuracy to ~1e-4..1e-3 rel.
    assert jnp.allclose(out, ref, rtol=2e-3, atol=2e-3)

    print("KERNEL_OK")
</pallas_src>

<mosaic_0001>
module attributes {stable_mosaic.version = 11 : i64} {
  func.func @_cross_attn_kernel(%arg0: i32, %arg1: memref<3xf32, #tpu.memory_space<smem>>, %arg2: memref<1x64xf32, #tpu.memory_space<vmem>>, %arg3: memref<1x64xf32, #tpu.memory_space<vmem>>, %arg4: memref<1x64xf32, #tpu.memory_space<vmem>>) attributes {dimension_semantics = [#tpu.dimension_semantics<parallel>], iteration_bounds = array<i64: 1>, scalar_prefetch = 0 : i64, scratch_operands = 0 : i64, tpu.core_type = #tpu.core_type<tc>, window_params = [{transform_indices = @transform_0, window_bounds = array<i64: 3>}, {transform_indices = @transform_1, window_bounds = array<i64: 1, 64>}, {transform_indices = @transform_2, window_bounds = array<i64: 1, 64>}, {transform_indices = @transform_3, window_bounds = array<i64: 1, 64>}]} {
    %c0 = arith.constant 0 : index
    %0 = memref.load %arg1[%c0] : memref<3xf32, #tpu.memory_space<smem>>
    %c1 = arith.constant 1 : index
    %1 = memref.load %arg1[%c1] : memref<3xf32, #tpu.memory_space<smem>>
    %cst = arith.constant 1.000000e+00 : f32
    %2 = arith.mulf %1, %cst : f32
    %c2 = arith.constant 2 : index
    %3 = memref.load %arg1[%c2] : memref<3xf32, #tpu.memory_space<smem>>
    %c0_0 = arith.constant 0 : index
    %c0_1 = arith.constant 0 : index
    %4 = vector.load %arg2[%c0_0, %c0_1] : memref<1x64xf32, #tpu.memory_space<vmem>>, vector<1x64xf32>
    %c0_2 = arith.constant 0 : index
    %c0_3 = arith.constant 0 : index
    %5 = vector.load %arg3[%c0_2, %c0_3] : memref<1x64xf32, #tpu.memory_space<vmem>>, vector<1x64xf32>
    %6 = vector.broadcast %0 : f32 to vector<1x64xf32>
    %7 = arith.mulf %4, %6 : vector<1x64xf32>
    %8 = vector.broadcast %2 : f32 to vector<1x64xf32>
    %9 = arith.mulf %5, %8 : vector<1x64xf32>
    %10 = vector.broadcast %3 : f32 to vector<1x64xf32>
    %11 = arith.mulf %5, %10 : vector<1x64xf32>
    %12 = tpu.transpose %7, [1, 0] : vector<1x64xf32> -> vector<64x1xf32>
    %13 = vector.broadcast %12 : vector<64x1xf32> to vector<64x64xf32>
    %14 = vector.broadcast %9 : vector<1x64xf32> to vector<64x64xf32>
    %15 = arith.mulf %13, %14 : vector<64x64xf32>
    %cst_4 = arith.constant dense<0xFF800000> : vector<64xf32>
    %16 = vector.multi_reduction <maximumf>, %15, %cst_4 [1] : vector<64x64xf32> to vector<64xf32>
    %17 = vector.shape_cast %16 : vector<64xf32> to vector<64x1xf32>
    %18 = vector.broadcast %17 : vector<64x1xf32> to vector<64x64xf32>
    %19 = arith.subf %15, %18 : vector<64x64xf32>
    %20 = math.exp %19 : vector<64x64xf32>
    %cst_5 = arith.constant dense<0.000000e+00> : vector<64xf32>
    %21 = vector.multi_reduction <add>, %20, %cst_5 [1] : vector<64x64xf32> to vector<64xf32>
    %22 = vector.shape_cast %21 : vector<64xf32> to vector<64x1xf32>
    %23 = tpu.reciprocal %22 {approx = true} : vector<64x1xf32> -> vector<64x1xf32>
    %24 = vector.broadcast %23 : vector<64x1xf32> to vector<64x64xf32>
    %25 = arith.mulf %20, %24 : vector<64x64xf32>
    %26 = vector.broadcast %11 : vector<1x64xf32> to vector<64x64xf32>
    %27 = arith.mulf %25, %26 : vector<64x64xf32>
    %cst_6 = arith.constant dense<0.000000e+00> : vector<64xf32>
    %28 = vector.multi_reduction <add>, %27, %cst_6 [1] : vector<64x64xf32> to vector<64xf32>
    %29 = vector.shape_cast %28 : vector<64xf32> to vector<64x1xf32>
    %30 = tpu.transpose %29, [1, 0] : vector<64x1xf32> -> vector<1x64xf32>
    %c0_7 = arith.constant 0 : index
    %c0_8 = arith.constant 0 : index
    %31 = vector.load %arg4[%c0_7, %c0_8] : memref<1x64xf32, #tpu.memory_space<vmem>>, vector<1x64xf32>
    tpu.vector_store %arg4[%c0_7, %c0_8], %30 {strides = array<i32>} : memref<1x64xf32, #tpu.memory_space<vmem>>, vector<1x64xf32>,
    return
  }
  func.func @transform_0(%arg0: i32) -> i32 {
    %c0_i32 = arith.constant 0 : i32
    %c0_i32_0 = arith.constant 0 : i32
    return %c0_i32 : i32
  }
  func.func @transform_1(%arg0: i32) -> (i32, i32) {
    %c0_i32 = arith.constant 0 : i32
    %c0_i32_0 = arith.constant 0 : i32
    return %arg0, %c0_i32 : i32, i32
  }
  func.func @transform_2(%arg0: i32) -> (i32, i32) {
    %c0_i32 = arith.constant 0 : i32
    %c0_i32_0 = arith.constant 0 : i32
    return %arg0, %c0_i32 : i32, i32
  }
  func.func @transform_3(%arg0: i32) -> (i32, i32) {
    %c0_i32 = arith.constant 0 : i32
    %c0_i32_0 = arith.constant 0 : i32
    return %arg0, %c0_i32 : i32, i32
  }
}

</mosaic_0001>

<llo_original>
// kernel: tpu_custom_call.1
$region0: #{tpu_custom_call.1}
  #allocation0 [shape = 'u32[]', space=smem, size = 0x4, offset = 0x4, fixed_abs, tag = 'smem constant byte address 0x4 - core index']
  #allocation1 [shape = 'u32[144,128]{1,0:T(1,128)}', space=vmem, size = 0x12000, scoped, tag = 'internal scratch']
  %s0 = inlined_call_operand.hbm [shape: f32[3], index: 0, kind: input, shape index: {}]
  %s1 = inlined_call_operand.vmem [shape: f32[1,64], index: 1, kind: input, shape index: {}]
  %s2 = inlined_call_operand.vmem [shape: f32[1,64], index: 2, kind: input, shape index: {}]
  %s3 = inlined_call_operand.hbm [shape: f32[1,64], index: 3, kind: output, shape index: {}]
  %s4 = sld [smem:[#allocation0]]
  $region26: #{tpu_custom_call.1} parent=0
    _
  %s6 = ssub.s32 1, %s4
  %s7 = scalar_select 0, %s6, %s4
  $region1: #{tpu_custom_call.1} parent=0
    #allocation2 [shape = 'u8[512]{0}', space=smem, size = 0x200, scoped, tag = 'input window, operand 0, single buffered']
    #allocation3 [shape = 's32[1]{0}', space=sflag, size = 0x4, scoped, tag = 'scoped memory for tpu_custom_call.1']
    #allocation4 [shape = 's32[1]{0}', space=sflag, size = 0x4, scoped, tag = 'scoped memory for tpu_custom_call.1']
    #allocation5 [shape = 'u8[512]{0}', space=vmem, size = 0x400, scoped, tag = 'output window, operand 0, single buffered']
    %8 = vsyncpa [#allocation4], 0
    %9 = vsyncpa [#allocation3], 0
    // Predicated region
    $region2: #{tpu_custom_call.1} parent=1 // pred_check
      _
    $region3: #{tpu_custom_call.1} parent=1 // pred_check_branch
      %11 = sbr.rel (0) target = $region5
    $region4: #{tpu_custom_call.1} parent=1 // pred_region
      %s13 = ssub.s32 16, 16
      %14 = vsyncadd [#allocation4], %s13
      %17 = dma.hbm_to_smem %s0, 16, [#allocation2], [#allocation4]
    $region5: #{tpu_custom_call.1} parent=1 // pred_fallthru
      _
    // Predicated region
    $region6: #{tpu_custom_call.1} parent=1 // pred_check
      _
    $region7: #{tpu_custom_call.1} parent=1 // pred_check_branch
      %19 = sbr.rel (0) target = $region9
    $region8: #{tpu_custom_call.1} parent=1 // pred_region
      _
    $region9: #{tpu_custom_call.1} parent=1 // pred_fallthru
      _
    // Predicated region
    $region10: #{tpu_custom_call.1} parent=1 // pred_check
      _
    $region11: #{tpu_custom_call.1} parent=1 // pred_check_branch
      %21 = sbr.rel (0) target = $region13
    $region12: #{tpu_custom_call.1} parent=1 // pred_region
      _
    $region13: #{tpu_custom_call.1} parent=1 // pred_fallthru
      _
    // Predicated region
    $region14: #{tpu_custom_call.1} parent=1 // pred_check
      _
    $region15: #{tpu_custom_call.1} parent=1 // pred_check_branch
      %23 = sbr.rel (0) target = $region17
    $region16: #{tpu_custom_call.1} parent=1 // pred_region
      %24 = dma.done [#allocation4], 16
    $region17: #{tpu_custom_call.1} parent=1 // pred_fallthru
      _
    %25 = sfence
    %s26 = sld [smem:[#allocation2]]
    %s27 = sld [smem:[#allocation2 + $0x1]]
    %s28 = sld [smem:[#allocation2 + $0x2]]
    %v29 = vld [vmem:[%s1] sm:$0x1]
    %v30 = vld [vmem:[%s2] sm:$0x1]
    %v31 = vstv %s26
    %v32 = vmul.f32 %v29, %v31
    %v33 = vstv %s27
    %v34 = vmul.f32 %v30, %v33
    %v35 = vstv %s28
    %v36 = vmul.f32 %v30, %v35
    %37 = vxpose.xlu0.b32.start [1/16] %v32, 128
    %38 = vxpose.xlu0.b32.cont [2/16] 0.0, 128
    %39 = vxpose.xlu0.b32.cont [3/16] 0.0, 128
    %40 = vxpose.xlu0.b32.cont [4/16] 0.0, 128
    %41 = vxpose.xlu0.b32.cont [5/16] 0.0, 128
    %42 = vxpose.xlu0.b32.cont [6/16] 0.0, 128
    %43 = vxpose.xlu0.b32.cont [7/16] 0.0, 128
    %44 = vxpose.xlu0.b32.cont [8/16] 0.0, 128
    %45 = vxpose.xlu0.b32.cont [9/16] 0.0, 128
    %46 = vxpose.xlu0.b32.cont [10/16] 0.0, 128
    %47 = vxpose.xlu0.b32.cont [11/16] 0.0, 128
    %48 = vxpose.xlu0.b32.cont [12/16] 0.0, 128
    %49 = vxpose.xlu0.b32.cont [13/16] 0.0, 128
    %50 = vxpose.xlu0.b32.cont [14/16] 0.0, 128
    %51 = vxpose.xlu0.b32.cont [15/16] 0.0, 128
    %52 = vxpose.xlu0.b32.end [16/16] 0.0, 128
    %v53 = vpop.trf.xlu0
    %v54 = vpop.trf.xlu0
    %v55 = vpop.trf.xlu0
    %v56 = vpop.trf.xlu0
    %v57 = vpop.trf.xlu0
    %v58 = vpop.trf.xlu0
    %v59 = vpop.trf.xlu0
    %v60 = vpop.trf.xlu0
    %v61 = vpop.trf.xlu0
    %v62 = vpop.trf.xlu0
    %v63 = vpop.trf.xlu0
    %v64 = vpop.trf.xlu0
    %v65 = vpop.trf.xlu0
    %v66 = vpop.trf.xlu0
    %v67 = vpop.trf.xlu0
    %v68 = vpop.trf.xlu0
    %70 = vset.pattern.permute.xlu0 0
    %71 = vperm.xlu0 %70, %v53
    %v72 = vpop.permute.xlu0 %71
    %75 = vset.pattern.permute.xlu0 0
    %76 = vperm.xlu0 %75, %v54
    %v77 = vpop.permute.xlu0 %76
    %80 = vset.pattern.permute.xlu0 0
    %81 = vperm.xlu0 %80, %v55
    %v82 = vpop.permute.xlu0 %81
    %85 = vset.pattern.permute.xlu0 0
    %86 = vperm.xlu0 %85, %v56
    %v87 = vpop.permute.xlu0 %86
    %90 = vset.pattern.permute.xlu0 0
    %91 = vperm.xlu0 %90, %v57
    %v92 = vpop.permute.xlu0 %91
    %95 = vset.pattern.permute.xlu0 0
    %96 = vperm.xlu0 %95, %v58
    %v97 = vpop.permute.xlu0 %96
    %100 = vset.pattern.permute.xlu0 0
    %101 = vperm.xlu0 %100, %v59
    %v102 = vpop.permute.xlu0 %101
    %105 = vset.pattern.permute.xlu0 0
    %106 = vperm.xlu0 %105, %v60
    %v107 = vpop.permute.xlu0 %106
    %v110 = vlaneseq
    %v111 = vshrl.u32 %v110, 7
    %v112 = vsub.s32 0, %v111
    %v113 = vrot.slane %v34, %v112
    %v115 = vmul.f32 %v72, %v113
    %v116 = vmul.f32 %v77, %v113
    %v117 = vmul.f32 %v82, %v113
    %v118 = vmul.f32 %v87, %v113
    %v119 = vmul.f32 %v92, %v113
    %v120 = vmul.f32 %v97, %v113
    %v121 = vmul.f32 %v102, %v113
    %v122 = vmul.f32 %v107, %v113
    %vm123 = vcmask 523264
    %v124 = vsel %vm123, %v115, -inf
    %125 = vmax.xlane.f32.xlu0 %v124
    %v126 = vpop.xlane.xlu0 %125
    %v127 = vsel %vm123, %v116, -inf
    %128 = vmax.xlane.f32.xlu0 %v127
    %v129 = vpop.xlane.xlu0 %128
    %v130 = vsel %vm123, %v117, -inf
    %131 = vmax.xlane.f32.xlu0 %v130
    %v132 = vpop.xlane.xlu0 %131
    %v133 = vsel %vm123, %v118, -inf
    %134 = vmax.xlane.f32.xlu0 %v133
    %v135 = vpop.xlane.xlu0 %134
    %v136 = vsel %vm123, %v119, -inf
    %137 = vmax.xlane.f32.xlu0 %v136
    %v138 = vpop.xlane.xlu0 %137
    %v139 = vsel %vm123, %v120, -inf
    %140 = vmax.xlane.f32.xlu0 %v139
    %v141 = vpop.xlane.xlu0 %140
    %v142 = vsel %vm123, %v121, -inf
    %143 = vmax.xlane.f32.xlu0 %v142
    %v144 = vpop.xlane.xlu0 %143
    %v145 = vsel %vm123, %v122, -inf
    %146 = vmax.xlane.f32.xlu0 %v145
    %v147 = vpop.xlane.xlu0 %146
    %v148 = vsub.f32 %v115, %v126
    %v149 = vsub.f32 %v116, %v129
    %v150 = vsub.f32 %v117, %v132
    %v151 = vsub.f32 %v118, %v135
    %v152 = vsub.f32 %v119, %v138
    %v153 = vsub.f32 %v120, %v141
    %v154 = vsub.f32 %v121, %v144
    %v155 = vsub.f32 %v122, %v147
    %v156 = vmul.f32 %v148, 1.442695
    %v157 = vpow.pop %v156
    %v158 = vmul.f32 %v149, 1.442695
    %v159 = vpow.pop %v158
    %v160 = vmul.f32 %v150, 1.442695
    %v161 = vpow.pop %v160
    %v162 = vmul.f32 %v151, 1.442695
    %v163 = vpow.pop %v162
    %v164 = vmul.f32 %v152, 1.442695
    %v165 = vpow.pop %v164
    %v166 = vmul.f32 %v153, 1.442695
    %v167 = vpow.pop %v166
    %v168 = vmul.f32 %v154, 1.442695
    %v169 = vpow.pop %v168
    %v170 = vmul.f32 %v155, 1.442695
    %v171 = vpow.pop %v170
    %v172 = vsel %vm123, %v157, 0.0
    %173 = vadd.xlane.f32.xlu0 %v172
    %v174 = vpop.xlane.xlu0 %173
    %v175 = vsel %vm123, %v159, 0.0
    %176 = vadd.xlane.f32.xlu0 %v175
    %v177 = vpop.xlane.xlu0 %176
    %v178 = vsel %vm123, %v161, 0.0
    %179 = vadd.xlane.f32.xlu0 %v178
    %v180 = vpop.xlane.xlu0 %179
    %v181 = vsel %vm123, %v163, 0.0
    %182 = vadd.xlane.f32.xlu0 %v181
    %v183 = vpop.xlane.xlu0 %182
    %v184 = vsel %vm123, %v165, 0.0
    %185 = vadd.xlane.f32.xlu0 %v184
    %v186 = vpop.xlane.xlu0 %185
    %v187 = vsel %vm123, %v167, 0.0
    %188 = vadd.xlane.f32.xlu0 %v187
    %v189 = vpop.xlane.xlu0 %188
    %v190 = vsel %vm123, %v169, 0.0
    %191 = vadd.xlane.f32.xlu0 %v190
    %v192 = vpop.xlane.xlu0 %191
    %v193 = vsel %vm123, %v171, 0.0
    %194 = vadd.xlane.f32.xlu0 %v193
    %v195 = vpop.xlane.xlu0 %194
    %v196 = vrcp.pop %v174
    %v197 = vrcp.pop %v177
    %v198 = vrcp.pop %v180
    %v199 = vrcp.pop %v183
    %v200 = vrcp.pop %v186
    %v201 = vrcp.pop %v189
    %v202 = vrcp.pop %v192
    %v203 = vrcp.pop %v195
    %v204 = vmul.f32 %v157, %v196
    %v205 = vmul.f32 %v159, %v197
    %v206 = vmul.f32 %v161, %v198
    %v207 = vmul.f32 %v163, %v199
    %v208 = vmul.f32 %v165, %v200
    %v209 = vmul.f32 %v167, %v201
    %v210 = vmul.f32 %v169, %v202
    %v211 = vmul.f32 %v171, %v203
    %v213 = vlaneseq
    %v214 = vshrl.u32 %v213, 7
    %v215 = vsub.s32 0, %v214
    %v216 = vrot.slane %v36, %v215
    %v218 = vmul.f32 %v204, %v216
    %v219 = vmul.f32 %v205, %v216
    %v220 = vmul.f32 %v206, %v216
    %v221 = vmul.f32 %v207, %v216
    %v222 = vmul.f32 %v208, %v216
    %v223 = vmul.f32 %v209, %v216
    %v224 = vmul.f32 %v210, %v216
    %v225 = vmul.f32 %v211, %v216
    %v226 = vsel %vm123, %v218, 0.0
    %227 = vadd.xlane.f32.xlu0 %v226
    %v228 = vpop.xlane.xlu0 %227
    %v229 = vsel %vm123, %v219, 0.0
    %230 = vadd.xlane.f32.xlu0 %v229
    %v231 = vpop.xlane.xlu0 %230
    %v232 = vsel %vm123, %v220, 0.0
    %233 = vadd.xlane.f32.xlu0 %v232
    %v234 = vpop.xlane.xlu0 %233
    %v235 = vsel %vm123, %v221, 0.0
    %236 = vadd.xlane.f32.xlu0 %v235
    %v237 = vpop.xlane.xlu0 %236
    %v238 = vsel %vm123, %v222, 0.0
    %239 = vadd.xlane.f32.xlu0 %v238
    %v240 = vpop.xlane.xlu0 %239
    %v241 = vsel %vm123, %v223, 0.0
    %242 = vadd.xlane.f32.xlu0 %v241
    %v243 = vpop.xlane.xlu0 %242
    %v244 = vsel %vm123, %v224, 0.0
    %245 = vadd.xlane.f32.xlu0 %v244
    %v246 = vpop.xlane.xlu0 %245
    %v247 = vsel %vm123, %v225, 0.0
    %248 = vadd.xlane.f32.xlu0 %v247
    %v249 = vpop.xlane.xlu0 %248
    %250 = vxpose.xlu0.b32.start [1/16] %v228, 128
    %251 = vxpose.xlu0.b32.cont [2/16] %v231, 128
    %252 = vxpose.xlu0.b32.cont [3/16] %v234, 128
    %253 = vxpose.xlu0.b32.cont [4/16] %v237, 128
    %254 = vxpose.xlu0.b32.cont [5/16] %v240, 128
    %255 = vxpose.xlu0.b32.cont [6/16] %v243, 128
    %256 = vxpose.xlu0.b32.cont [7/16] %v246, 128
    %257 = vxpose.xlu0.b32.cont [8/16] %v249, 128
    %258 = vxpose.xlu0.b32.cont [9/16] 0.0, 128
    %259 = vxpose.xlu0.b32.cont [10/16] 0.0, 128
    %260 = vxpose.xlu0.b32.cont [11/16] 0.0, 128
    %261 = vxpose.xlu0.b32.cont [12/16] 0.0, 128
    %262 = vxpose.xlu0.b32.cont [13/16] 0.0, 128
    %263 = vxpose.xlu0.b32.cont [14/16] 0.0, 128
    %264 = vxpose.xlu0.b32.cont [15/16] 0.0, 128
    %265 = vxpose.xlu0.b32.end [16/16] 0.0, 128
    %v266 = vpop.trf.xlu0
    %v267 = vpop.trf.xlu0
    %v268 = vpop.trf.xlu0
    %v269 = vpop.trf.xlu0
    %v270 = vpop.trf.xlu0
    %v271 = vpop.trf.xlu0
    %v272 = vpop.trf.xlu0
    %v273 = vpop.trf.xlu0
    %v274 = vpop.trf.xlu0
    %v275 = vpop.trf.xlu0
    %v276 = vpop.trf.xlu0
    %v277 = vpop.trf.xlu0
    %v278 = vpop.trf.xlu0
    %v279 = vpop.trf.xlu0
    %v280 = vpop.trf.xlu0
    %v281 = vpop.trf.xlu0
    %vm282 = vcmask 516096
    %283 = vst.msk [vmem:[#allocation5] sm:$0x1] %vm282, %v266
    // Predicated region
    $region18: #{tpu_custom_call.1} parent=1 // pred_check
      _
    $region19: #{tpu_custom_call.1} parent=1 // pred_check_branch
      %285 = sbr.rel (0) target = $region21
    $region20: #{tpu_custom_call.1} parent=1 // pred_region
      %s287 = ssub.s32 16, 16
      %288 = vsyncadd [#allocation3], %s287
      %s290 = sshll.u32 [#allocation5], 4
      %s291 = int_to_ptr.vmem [resolvable:$true] %s290
      %293 = dma.vmem_to_hbm [thread:$0]  %s291, 16, %s3, [#allocation3]
    $region21: #{tpu_custom_call.1} parent=1 // pred_fallthru
      _
    // Predicated region
    $region22: #{tpu_custom_call.1} parent=1 // pred_check
      _
    $region23: #{tpu_custom_call.1} parent=1 // pred_check_branch
      %295 = sbr.rel (0) target = $region25
    $region24: #{tpu_custom_call.1} parent=1 // pred_region
      %296 = dma.done [#allocation3], 16
    $region25: #{tpu_custom_call.1} parent=1 // pred_fallthru
      _
    %297 = vsyncpa [#allocation3], 1
    %298 = vsyncpa [#allocation4], 1

</llo_original>
